<compile_context>
chip_gen: v7x
topology: tpu7x:2x2x1
jax: 0.10.0
libtpu: 0.0.40
codegen_flags: <defaults>
</compile_context>

<pallas_src>
import jax
import jax.numpy as jnp
import numpy as np
from jax.experimental import pallas as pl
from jax.experimental.pallas import tpu as pltpu


def gpt_forward_kernel(xt_ref, at_ref, ct_ref, w2ct_ref, bias_ref, ut_ref):
    """One lane-tile of rows.

    xt_ref   : (D, TN)      input rows, transposed (rows on the lane axis)
    at_ref   : (MHp, D)     fused first-layer weight A^T   (MHp = M*H padded to 128 lanes)
    ct_ref   : (MHp, 1)     fused first-layer bias
    w2ct_ref : (OUT, MHp)   fused second-layer weight (W2C)^T
    bias_ref : (OUT, 1)     fused output bias  sum_m b2[m] * c[:, m]
    ut_ref   : (OUT, TN)    output rows, transposed (lane-dense store)
    """
    xt = xt_ref[...]                                       # (D, TN)
    at = at_ref[...]                                       # (MHp, D)
    d_in = xt.shape[0]

    # Pre-activation: rank-1 outer-product accumulation over the tiny D axis (pure VPU).
    # (MHp,1) * (1,TN) broadcasts to (MHp,TN); no degenerate K=2 matmuls on the MXU.
    pre = ct_ref[...] + at[:, 0:1] * xt[0:1, :]
    for d in range(1, d_in):                               # D is small & static -> unrolled
        pre = pre + at[:, d:d + 1] * xt[d:d + 1, :]

    h = jnp.tanh(pre)                                      # (MHp, TN): one EUP pass

    # Fused H-reduction + final c-contraction: the only (well-shaped, K = MHp >= 128) MXU op.
    u = jnp.dot(w2ct_ref[...], h, preferred_element_type=jnp.float32)   # (OUT, TN)
    ut_ref[...] = (u + bias_ref[...]).astype(ut_ref.dtype)


def gpt_forward(x, w, b, w1, b1, w2, b2, c, *, tile_n=None):
    """Pallas wrapper.  All packing / transposes are one-time XLA glue outside the kernel."""
    N, D = x.shape
    M = w.shape[0]
    H = w1.shape[-1]
    OUT = c.shape[0]
    MH = M * H
    MHp = max(128, ((MH + 127) // 128) * 128)              # lane-align the fused hidden axis

    if tile_n is None:
        tile_n = min(N, 512)
    assert N % tile_n == 0, "N must be a multiple of tile_n"
    assert tile_n % 128 == 0 or tile_n == N, "tile_n must be lane-aligned"

    f32 = jnp.float32
    xf = x.astype(f32)
    wf, bf = w.astype(f32), b.astype(f32)
    w1f, b1f = w1.astype(f32), b1.astype(f32)
    w2f, b2f = w2.astype(f32), b2.astype(f32)
    cf = c.astype(f32)

    # ---- exact algebraic fusion of (per-branch Linear, row 0) -> P[i] -> final Linear ----
    w0 = wf[:, 0, :]                                                    # (M, D) row 0 of W_i
    A = (w0[:, :, None] * w1f[:, 0, :][:, None, :])                     # (M, D, H)
    A = A.transpose(1, 0, 2).reshape(D, MH)                             # (D, M*H)
    Cvec = (bf[:, 0, 0:1] * w1f[:, 0, :] + b1f[:, 0, :]).reshape(MH)    # (M*H,)
    W2C = (w2f[:, 0, :, None] * cf.T[:, None, :]).reshape(MH, OUT)      # (M*H, OUT)
    bias = (cf @ b2f[:, 0, :]).reshape(OUT, 1)                          # (OUT, 1)

    if MHp != MH:                              # zero-padded rows/cols contribute nothing
        A = jnp.pad(A, ((0, 0), (0, MHp - MH)))
        Cvec = jnp.pad(Cvec, (0, MHp - MH))
        W2C = jnp.pad(W2C, ((0, MHp - MH), (0, 0)))

    xt = xf.T                                                           # (D, N)
    At = A.T                                                            # (MHp, D)
    Ct = Cvec.reshape(MHp, 1)                                           # (MHp, 1)
    W2Ct = W2C.T                                                        # (OUT, MHp)

    resident = lambda n: (0, 0)

    u_t = pl.pallas_call(
        gpt_forward_kernel,
        out_shape=jax.ShapeDtypeStruct((OUT, N), f32),
        grid_spec=pltpu.PrefetchScalarGridSpec(
            num_scalar_prefetch=0,
            grid=(N // tile_n,),
            in_specs=[
                pl.BlockSpec((D, tile_n), lambda n: (0, n)),   # x^T, tiled along lanes
                pl.BlockSpec((MHp, D), resident),              # A^T          (resident)
                pl.BlockSpec((MHp, 1), resident),              # C            (resident)
                pl.BlockSpec((OUT, MHp), resident),            # (W2C)^T      (resident)
                pl.BlockSpec((OUT, 1), resident),              # output bias  (resident)
            ],
            out_specs=pl.BlockSpec((OUT, tile_n), lambda n: (0, n)),
        ),
        compiler_params=pltpu.CompilerParams(
            dimension_semantics=("parallel",)),
    )(xt, At, Ct, W2Ct, bias)

    return u_t.T                                                        # (N, OUT)


def gpt_forward_ref(x, w, b, w1, b1, w2, b2, c):
    """Pure-JAX reference mirroring the PyTorch forward (unfused)."""
    x = x.astype(jnp.float32)
    feats = []
    for i in range(w.shape[0]):
        z = x @ w[i].T + b[i, 0]
        z0 = z[:, :1]
        h = jnp.tanh(z0 * w1[i] + b1[i])
        a_i = jnp.sum(h * w2[i], axis=1, keepdims=True) + b2[i]
        feats.append(a_i)
    a = jnp.concatenate(feats, axis=1)
    return a @ c.T


if __name__ == "__main__":
    # layers = [D, M, OUT]; M branch networks; H = hidden width of each P[i].  M*H = 128.
    N, D, M, H, OUT = 1024, 2, 4, 32, 1

    key = jax.random.PRNGKey(0)
    k_x, k_w, k_b, k_w1, k_b1, k_w2, k_b2, k_c = jax.random.split(key, 8)

    x = jax.random.uniform(k_x, (N, D), jnp.float32, -1.0, 1.0)          # x_data

    # __init__ sets linears[i].weight = eye(D), bias = zeros(D); perturb slightly so the
    # full packed-weight path (both input columns, nonzero biases) is exercised.
    w = (jnp.broadcast_to(jnp.eye(D, dtype=jnp.float32), (M, D, D))
         + 0.1 * jax.random.normal(k_w, (M, D, D), jnp.float32))
    b = 0.1 * jax.random.normal(k_b, (M, 1, D), jnp.float32)

    # Synthetic deterministic "pre-trained" activation networks P[i] (1 -> H -> 1 tanh MLPs).
    w1 = jax.random.normal(k_w1, (M, 1, H), jnp.float32)
    b1 = 0.1 * jax.random.normal(k_b1, (M, 1, H), jnp.float32)
    w2 = jax.random.normal(k_w2, (M, 1, H), jnp.float32) / jnp.sqrt(H)
    b2 = 0.1 * jax.random.normal(k_b2, (M, 1, 1), jnp.float32)

    # initial_c : weight of final Linear(M, OUT, bias=False), PyTorch shape (OUT, M)
    c = jax.random.normal(k_c, (OUT, M), jnp.float32)

    u = gpt_forward(x, w, b, w1, b1, w2, b2, c)
    jax.block_until_ready(u)

    u_ref = gpt_forward_ref(x, w, b, w1, b1, w2, b2, c)
    np.testing.assert_allclose(np.asarray(u), np.asarray(u_ref),
                               rtol=1e-5, atol=2e-5)

    # TODO(synk): loss() (nn.MSELoss against u_exact) is trivial host-side glue, not ported.
    print("KERNEL_OK")
</pallas_src>

<mosaic_0001>
module attributes {stable_mosaic.version = 11 : i64} {
  func.func @gpt_forward_kernel(%arg0: i32, %arg1: memref<2x512xf32, #tpu.memory_space<vmem>>, %arg2: memref<128x2xf32, #tpu.memory_space<vmem>>, %arg3: memref<128x1xf32, #tpu.memory_space<vmem>>, %arg4: memref<1x128xf32, #tpu.memory_space<vmem>>, %arg5: memref<1x1xf32, #tpu.memory_space<vmem>>, %arg6: memref<1x512xf32, #tpu.memory_space<vmem>>) attributes {dimension_semantics = [#tpu.dimension_semantics<parallel>], iteration_bounds = array<i64: 2>, scalar_prefetch = 0 : i64, scratch_operands = 0 : i64, tpu.core_type = #tpu.core_type<tc>, window_params = [{transform_indices = @transform_0, window_bounds = array<i64: 2, 512>}, {pipeline_mode = #tpu.pipeline_mode<synchronous>, transform_indices = @transform_1, window_bounds = array<i64: 128, 2>}, {pipeline_mode = #tpu.pipeline_mode<synchronous>, transform_indices = @transform_2, window_bounds = array<i64: 128, 1>}, {pipeline_mode = #tpu.pipeline_mode<synchronous>, transform_indices = @transform_3, window_bounds = array<i64: 1, 128>}, {pipeline_mode = #tpu.pipeline_mode<synchronous>, transform_indices = @transform_4, window_bounds = array<i64: 1, 1>}, {transform_indices = @transform_5, window_bounds = array<i64: 1, 512>}]} {
    %c0 = arith.constant 0 : index
    %c0_0 = arith.constant 0 : index
    %0 = vector.load %arg1[%c0, %c0_0] : memref<2x512xf32, #tpu.memory_space<vmem>>, vector<2x512xf32>
    %c0_1 = arith.constant 0 : index
    %c0_2 = arith.constant 0 : index
    %1 = vector.load %arg2[%c0_1, %c0_2] : memref<128x2xf32, #tpu.memory_space<vmem>>, vector<128x2xf32>
    %c0_3 = arith.constant 0 : index
    %c0_4 = arith.constant 0 : index
    %2 = vector.load %arg3[%c0_3, %c0_4] : memref<128x1xf32, #tpu.memory_space<vmem>>, vector<128x1xf32>
    %3 = vector.extract_strided_slice %1 {offsets = [0, 0], sizes = [128, 1], strides = [1, 1]} : vector<128x2xf32> to vector<128x1xf32>
    %4 = vector.extract_strided_slice %0 {offsets = [0, 0], sizes = [1, 512], strides = [1, 1]} : vector<2x512xf32> to vector<1x512xf32>
    %5 = vector.broadcast %3 : vector<128x1xf32> to vector<128x512xf32>
    %6 = vector.broadcast %4 : vector<1x512xf32> to vector<128x512xf32>
    %7 = arith.mulf %5, %6 : vector<128x512xf32>
    %8 = vector.broadcast %2 : vector<128x1xf32> to vector<128x512xf32>
    %9 = arith.addf %8, %7 : vector<128x512xf32>
    %10 = vector.extract_strided_slice %1 {offsets = [0, 1], sizes = [128, 1], strides = [1, 1]} : vector<128x2xf32> to vector<128x1xf32>
    %11 = vector.extract_strided_slice %0 {offsets = [1, 0], sizes = [1, 512], strides = [1, 1]} : vector<2x512xf32> to vector<1x512xf32>
    %12 = vector.broadcast %10 : vector<128x1xf32> to vector<128x512xf32>
    %13 = vector.broadcast %11 : vector<1x512xf32> to vector<128x512xf32>
    %14 = arith.mulf %12, %13 : vector<128x512xf32>
    %15 = arith.addf %9, %14 : vector<128x512xf32>
    %16 = math.tanh %15 : vector<128x512xf32>
    %c0_5 = arith.constant 0 : index
    %c0_6 = arith.constant 0 : index
    %17 = vector.load %arg4[%c0_5, %c0_6] : memref<1x128xf32, #tpu.memory_space<vmem>>, vector<1x128xf32>
    %cst = arith.constant dense<0.000000e+00> : vector<1x512xf32>
    %18 = tpu.matmul %17, %16, %cst {dimension_numbers = #tpu.dot_dimension_numbers<[1], [0], [0], [1], [0, 0, 1, 1], [], []>} : vector<1x128xf32>, vector<128x512xf32>, vector<1x512xf32> -> vector<1x512xf32>
    %c0_7 = arith.constant 0 : index
    %c0_8 = arith.constant 0 : index
    %19 = vector.load %arg5[%c0_7, %c0_8] : memref<1x1xf32, #tpu.memory_space<vmem>>, vector<1x1xf32>
    %20 = vector.broadcast %19 : vector<1x1xf32> to vector<1x512xf32>
    %21 = arith.addf %18, %20 : vector<1x512xf32>
    %c0_9 = arith.constant 0 : index
    %c0_10 = arith.constant 0 : index
    %22 = vector.load %arg6[%c0_9, %c0_10] : memref<1x512xf32, #tpu.memory_space<vmem>>, vector<1x512xf32>
    tpu.vector_store %arg6[%c0_9, %c0_10], %21 {strides = array<i32>} : memref<1x512xf32, #tpu.memory_space<vmem>>, vector<1x512xf32>,
    return
  }
  func.func @transform_0(%arg0: i32) -> (i32, i32) {
    %c0_i32 = arith.constant 0 : i32
    %c0_i32_0 = arith.constant 0 : i32
    return %c0_i32, %arg0 : i32, i32
  }
  func.func @transform_1(%arg0: i32) -> (i32, i32) {
    %c0_i32 = arith.constant 0 : i32
    %c0_i32_0 = arith.constant 0 : i32
    %c0_i32_1 = arith.constant 0 : i32
    return %c0_i32, %c0_i32_0 : i32, i32
  }
  func.func @transform_2(%arg0: i32) -> (i32, i32) {
    %c0_i32 = arith.constant 0 : i32
    %c0_i32_0 = arith.constant 0 : i32
    %c0_i32_1 = arith.constant 0 : i32
    return %c0_i32, %c0_i32_0 : i32, i32
  }
  func.func @transform_3(%arg0: i32) -> (i32, i32) {
    %c0_i32 = arith.constant 0 : i32
    %c0_i32_0 = arith.constant 0 : i32
    %c0_i32_1 = arith.constant 0 : i32
    return %c0_i32, %c0_i32_0 : i32, i32
  }
  func.func @transform_4(%arg0: i32) -> (i32, i32) {
    %c0_i32 = arith.constant 0 : i32
    %c0_i32_0 = arith.constant 0 : i32
    %c0_i32_1 = arith.constant 0 : i32
    return %c0_i32, %c0_i32_0 : i32, i32
  }
  func.func @transform_5(%arg0: i32) -> (i32, i32) {
    %c0_i32 = arith.constant 0 : i32
    %c0_i32_0 = arith.constant 0 : i32
    return %c0_i32, %arg0 : i32, i32
  }
}

</mosaic_0001>

<llo_original>
// kernel: tpu_custom_call.1
$region0: #{tpu_custom_call.1}
  #allocation0 [shape = 'u32[]', space=smem, size = 0x4, offset = 0x4, fixed_abs, tag = 'smem constant byte address 0x4 - core index']
  #allocation1 [shape = 'u32[144,128]{1,0:T(1,128)}', space=vmem, size = 0x12000, scoped, tag = 'internal scratch']
  #allocation2 [shape = 'f32[1,1]{1,0:T(1,128)S(1)}', space=vmem, size = 0x200, scoped, tag = 'scoped memory for tpu_custom_call.1']
  %s0 = inlined_call_operand.vmem [shape: f32[2,1024], index: 0, kind: input, shape index: {}]
  %s1 = inlined_call_operand.vmem [shape: f32[128,2], index: 1, kind: input, shape index: {}]
  %s2 = inlined_call_operand.vmem [shape: f32[128,1], index: 2, kind: input, shape index: {}]
  %s3 = inlined_call_operand.vmem [shape: f32[1,128], index: 3, kind: input, shape index: {}]
  %s4 = inlined_call_operand.<no memory space> [shape: f32[1,1], index: 4, kind: input, shape index: {}]
  %s5 = inlined_call_operand.hbm [shape: f32[1,1024], index: 5, kind: output, shape index: {}]
  %s6 = sld [smem:[#allocation0]]
  $region53: #{tpu_custom_call.1} parent=0
    _
  %s8 = ssub.s32 1, %s6
  %s9 = scalar_select 0, %s8, %s6
  %v10 = vstv %s4
  %11 = vst [vmem:[#allocation2] sm:$0x1] %v10
  $region1: #{tpu_custom_call.1} parent=0
    #allocation3 [shape = 'u8[4096]{0}', space=vmem, size = 0x1000, scoped, tag = 'output window, operand 0']
    #allocation4 [shape = 's32[2]{0}', space=sflag, size = 0x8, scoped, tag = 'scoped memory for tpu_custom_call.1']
    %12 = vsyncpa [#allocation4], 0
    %s13 = scalar_lea.sflag [#allocation4], 1
    %14 = vsyncpa %s13, 0
    loop: start=0, step=1, limit=4
    $region2: #{tpu_custom_call.1} parent=1 // loop_pre_header
      _
    $region3: #{tpu_custom_call.1} parent=1 // loop_header
      %s16 = sphi 0, %s20
      %p17 = scmp.ge.s32.totalorder %s16, 4
      %s26 = sphi 0, %s28
      %s29 = sphi 0, %s26
      %s30 = sphi 0, %s29
      %s46 = sphi 0, %s30
      %s50 = sphi 0, %s50
      %s52 = sphi 0, %s50
      %s53 = sphi 0, %s52
      %s67 = sphi 0, %s53
      %s71 = sphi 0, %s71
      %s73 = sphi 0, %s71
      %s74 = sphi 0, %s73
      %s88 = sphi 0, %s74
      %s92 = sphi 0, %s92
      %s94 = sphi 0, %s92
      %s95 = sphi 0, %s94
      %s109 = sphi 0, %s95
      %s113 = sphi 0, %s113
      %s115 = sphi 0, %s113
      %s116 = sphi 0, %s115
      %s130 = sphi 0, %s116
      %s136 = sphi 0, %s138
      %s139 = sphi 0, %s136
      %s140 = sphi 0, %s139
      %s156 = sphi 0, %s140
    $region4: #{tpu_custom_call.1} parent=1 // loop_header_branch
      %19 = sbr.rel (%p17) target = $region8
    $region5: #{tpu_custom_call.1} parent=1 // loop_body
      %s21 = ssub.s32 %s16, 1
      %s22 = ssub.s32 %s16, 2
      %s23 = sadd.s32 %s16, 1
      %s24 = ssub.s32 %s16, %s23
      %p25 = scmp.eq.s32.totalorder %s24, 0
      %s27 = sadd.s32 %s26, 1
      %s28 = scalar_select %p25, %s26, %s27
      %p31 = pneg %p25
      %p32 = scmp.eq.s32.totalorder %s16, 1
      %p33 = por %p31, %p32
      %p34 = scmp.ne.s32.totalorder %s26, %s29
      %p35 = scmp.eq.s32.totalorder %s16, 0
      %p36 = por %p34, %p35
      %p37 = scmp.ne.s32.totalorder %s26, %s29
      %p38 = scmp.eq.s32.totalorder %s21, 1
      %p39 = por %p37, %p38
      %p40 = scmp.ne.s32.totalorder %s29, %s30
      %p41 = scmp.eq.s32.totalorder %s21, 0
      %p42 = por %p40, %p41
      %p43 = scmp.ne.s32.totalorder %s29, %s30
      %p44 = scmp.eq.s32.totalorder %s22, 1
      %p45 = por %p43, %p44
      %p47 = scmp.ne.s32.totalorder %s30, %s46
      %p48 = scmp.eq.s32.totalorder %s22, 0
      %p49 = por %p47, %p48
      %s51 = sadd.s32 %s50, 1
      %p54 = scmp.eq.s32.totalorder %s16, 1
      %p55 = scmp.ne.s32.totalorder %s50, %s52
      %p56 = scmp.eq.s32.totalorder %s16, 0
      %p57 = por %p55, %p56
      %p58 = scmp.ne.s32.totalorder %s50, %s52
      %p59 = scmp.eq.s32.totalorder %s21, 1
      %p60 = por %p58, %p59
      %p61 = scmp.ne.s32.totalorder %s52, %s53
      %p62 = scmp.eq.s32.totalorder %s21, 0
      %p63 = por %p61, %p62
      %p64 = scmp.ne.s32.totalorder %s52, %s53
      %p65 = scmp.eq.s32.totalorder %s22, 1
      %p66 = por %p64, %p65
      %p68 = scmp.ne.s32.totalorder %s53, %s67
      %p69 = scmp.eq.s32.totalorder %s22, 0
      %p70 = por %p68, %p69
      %s72 = sadd.s32 %s71, 1
      %p75 = scmp.eq.s32.totalorder %s16, 1
      %p76 = scmp.ne.s32.totalorder %s71, %s73
      %p77 = scmp.eq.s32.totalorder %s16, 0
      %p78 = por %p76, %p77
      %p79 = scmp.ne.s32.totalorder %s71, %s73
      %p80 = scmp.eq.s32.totalorder %s21, 1
      %p81 = por %p79, %p80
      %p82 = scmp.ne.s32.totalorder %s73, %s74
      %p83 = scmp.eq.s32.totalorder %s21, 0
      %p84 = por %p82, %p83
      %p85 = scmp.ne.s32.totalorder %s73, %s74
      %p86 = scmp.eq.s32.totalorder %s22, 1
      %p87 = por %p85, %p86
      %p89 = scmp.ne.s32.totalorder %s74, %s88
      %p90 = scmp.eq.s32.totalorder %s22, 0
      %p91 = por %p89, %p90
      %s93 = sadd.s32 %s92, 1
      %p96 = scmp.eq.s32.totalorder %s16, 1
      %p97 = scmp.ne.s32.totalorder %s92, %s94
      %p98 = scmp.eq.s32.totalorder %s16, 0
      %p99 = por %p97, %p98
      %p100 = scmp.ne.s32.totalorder %s92, %s94
      %p101 = scmp.eq.s32.totalorder %s21, 1
      %p102 = por %p100, %p101
      %p103 = scmp.ne.s32.totalorder %s94, %s95
      %p104 = scmp.eq.s32.totalorder %s21, 0
      %p105 = por %p103, %p104
      %p106 = scmp.ne.s32.totalorder %s94, %s95
      %p107 = scmp.eq.s32.totalorder %s22, 1
      %p108 = por %p106, %p107
      %p110 = scmp.ne.s32.totalorder %s95, %s109
      %p111 = scmp.eq.s32.totalorder %s22, 0
      %p112 = por %p110, %p111
      %s114 = sadd.s32 %s113, 1
      %p117 = scmp.eq.s32.totalorder %s16, 1
      %p118 = scmp.ne.s32.totalorder %s113, %s115
      %p119 = scmp.eq.s32.totalorder %s16, 0
      %p120 = por %p118, %p119
      %p121 = scmp.ne.s32.totalorder %s113, %s115
      %p122 = scmp.eq.s32.totalorder %s21, 1
      %p123 = por %p121, %p122
      %p124 = scmp.ne.s32.totalorder %s115, %s116
      %p125 = scmp.eq.s32.totalorder %s21, 0
      %p126 = por %p124, %p125
      %p127 = scmp.ne.s32.totalorder %s115, %s116
      %p128 = scmp.eq.s32.totalorder %s22, 1
      %p129 = por %p127, %p128
      %p131 = scmp.ne.s32.totalorder %s116, %s130
      %p132 = scmp.eq.s32.totalorder %s22, 0
      %p133 = por %p131, %p132
      %s134 = ssub.s32 %s16, %s23
      %p135 = scmp.eq.s32.totalorder %s134, 0
      %s137 = sadd.s32 %s136, 1
      %s138 = scalar_select %p135, %s136, %s137
      %p141 = pneg %p135
      %p142 = scmp.eq.s32.totalorder %s16, 1
      %p143 = por %p141, %p142
      %p144 = scmp.ne.s32.totalorder %s136, %s139
      %p145 = scmp.eq.s32.totalorder %s16, 0
      %p146 = por %p144, %p145
      %p147 = scmp.ne.s32.totalorder %s136, %s139
      %p148 = scmp.eq.s32.totalorder %s21, 1
      %p149 = por %p147, %p148
      %p150 = scmp.ne.s32.totalorder %s139, %s140
      %p151 = scmp.eq.s32.totalorder %s21, 0
      %p152 = por %p150, %p151
      %p153 = scmp.ne.s32.totalorder %s139, %s140
      %p154 = scmp.eq.s32.totalorder %s22, 1
      %p155 = por %p153, %p154
      %p157 = scmp.ne.s32.totalorder %s140, %s156
      %p158 = scmp.eq.s32.totalorder %s22, 0
      %p159 = por %p157, %p158
      %p160 = scmp.le.s32.totalorder 1, %s16
      %p161 = scmp.lt.s32.totalorder %s16, 3
      %p162 = pnand %p160, %p161
      %p163 = pneg %p162
      // Predicated region
      $region9: #{tpu_custom_call.1} parent=5 // pred_check
        _
      $region10: #{tpu_custom_call.1} parent=5 // pred_check_branch
        %165 = sbr.rel (%p162) target = $region12
      $region11: #{tpu_custom_call.1} parent=5 // pred_region
        %s166 = ssub.s32 %s16, 1
        // Predicated region
        $region13: #{tpu_custom_call.1} parent=11 // pred_check
          %p167 = pneg %p63
        $region14: #{tpu_custom_call.1} parent=11 // pred_check_branch
          %169 = sbr.rel (%p167) target = $region16
        $region15: #{tpu_custom_call.1} parent=11 // pred_region
          _
        $region16: #{tpu_custom_call.1} parent=11 // pred_fallthru
          _
        // Predicated region
        $region17: #{tpu_custom_call.1} parent=11 // pred_check
          %p170 = pneg %p84
        $region18: #{tpu_custom_call.1} parent=11 // pred_check_branch
          %172 = sbr.rel (%p170) target = $region20
        $region19: #{tpu_custom_call.1} parent=11 // pred_region
          _
        $region20: #{tpu_custom_call.1} parent=11 // pred_fallthru
          _
        // Predicated region
        $region21: #{tpu_custom_call.1} parent=11 // pred_check
          %p173 = pneg %p105
        $region22: #{tpu_custom_call.1} parent=11 // pred_check_branch
          %175 = sbr.rel (%p173) target = $region24
        $region23: #{tpu_custom_call.1} parent=11 // pred_region
          _
        $region24: #{tpu_custom_call.1} parent=11 // pred_fallthru
          _
        // Predicated region
        $region25: #{tpu_custom_call.1} parent=11 // pred_check
          %p176 = pneg %p126
        $region26: #{tpu_custom_call.1} parent=11 // pred_check_branch
          %178 = sbr.rel (%p176) target = $region28
        $region27: #{tpu_custom_call.1} parent=11 // pred_region
          _
        $region28: #{tpu_custom_call.1} parent=11 // pred_fallthru
          _
      $region12: #{tpu_custom_call.1} parent=5 // pred_fallthru
        _
      %p179 = scmp.lt.s32.totalorder %s16, 2
      // Predicated region
      $region29: #{tpu_custom_call.1} parent=5 // pred_check
        %p180 = pneg %p179
      $region30: #{tpu_custom_call.1} parent=5 // pred_check_branch
        %182 = sbr.rel (%p180) target = $region32
      $region31: #{tpu_custom_call.1} parent=5 // pred_region
        // Predicated region
        $region33: #{tpu_custom_call.1} parent=31 // pred_check
          %p183 = pneg %p36
        $region34: #{tpu_custom_call.1} parent=31 // pred_check_branch
          %185 = sbr.rel (%p183) target = $region36
        $region35: #{tpu_custom_call.1} parent=31 // pred_region
          %s186 = smul.u32 4, %s16
          %p187 = scmp.lt.s32.totalorder %s186, 7
          %s188 = scalar_select %p187, %s186, 7
          %s189 = smul.addr %s188, 2
          %s190 = scalar_lea.vmem %s0, %s189
          %s191 = smul.u32 4, %s16
        $region36: #{tpu_custom_call.1} parent=31 // pred_fallthru
          _
      $region32: #{tpu_custom_call.1} parent=5 // pred_fallthru
        _
      %p192 = scmp.le.s32.totalorder 1, %s16
      %p193 = scmp.lt.s32.totalorder %s16, 3
      %p194 = pnand %p192, %p193
      %p195 = pneg %p194
      // Predicated region
      $region37: #{tpu_custom_call.1} parent=5 // pred_check
        _
      $region38: #{tpu_custom_call.1} parent=5 // pred_check_branch
        %197 = sbr.rel (%p194) target = $region40
      $region39: #{tpu_custom_call.1} parent=5 // pred_region
        %s198 = ssub.s32 %s16, 1
        %s199 = smul.u32 4, %s21
        %p200 = scmp.lt.s32.totalorder %s199, 7
        %s201 = scalar_select %p200, %s199, 7
        %s202 = smul.addr %s201, 2
        %s203 = scalar_lea.vmem %s0, %s202
        %p204 = pneg %p42
        %p205 = pneg %p39
        %p206 = pneg %p63
        %p207 = pneg %p60
        %p208 = pneg %p84
        %p209 = pneg %p81
        %p210 = pneg %p105
        %p211 = pneg %p102
        %p212 = pneg %p126
        %p213 = pneg %p123
        %p214 = pneg %p152
        %p215 = pneg %p149
        %s216 = sand.u32 %s139, 1
        %s217 = scalar_lea.sflag [#allocation4], %s216
        %s218 = sand.u32 %s139, 1
        %s219 = smul.addr %s218, 4
        %s220 = scalar_lea.vmem [#allocation3], %s219
        %s221 = smul.u32 4, %s21
        %p222 = scmp.lt.s32.totalorder %s221, 7
        %s223 = scalar_select %p222, %s221, 7
        %s224 = smul.addr %s223, 2
        %s225 = scalar_lea.vmem %s0, %s224
        %s226 = smul.u32 4, %s21
        %s227 = smul.u32 4, %s21
        %v228 = vld [vmem:[%s225] sm:$0xff]
        %v229 = vld [vmem:[%s1] sm:$0xff]
        %v230 = vld [vmem:[%s1 + $0x8] sm:$0xff]
        %v231 = vld [vmem:[%s1 + $0x10] sm:$0xff]
        %v232 = vld [vmem:[%s1 + $0x18] sm:$0xff]
        %v233 = vld [vmem:[%s1 + $0x20] sm:$0xff]
        %v234 = vld [vmem:[%s1 + $0x28] sm:$0xff]
        %v235 = vld [vmem:[%s1 + $0x30] sm:$0xff]
        %v236 = vld [vmem:[%s1 + $0x38] sm:$0xff]
        %v237 = vld [vmem:[%s1 + $0x40] sm:$0xff]
        %v238 = vld [vmem:[%s1 + $0x48] sm:$0xff]
        %v239 = vld [vmem:[%s1 + $0x50] sm:$0xff]
        %v240 = vld [vmem:[%s1 + $0x58] sm:$0xff]
        %v241 = vld [vmem:[%s1 + $0x60] sm:$0xff]
        %v242 = vld [vmem:[%s1 + $0x68] sm:$0xff]
        %v243 = vld [vmem:[%s1 + $0x70] sm:$0xff]
        %v244 = vld [vmem:[%s1 + $0x78] sm:$0xff]
        %v245 = vld [vmem:[%s2] sm:$0xff]
        %v246 = vld [vmem:[%s2 + $0x8] sm:$0xff]
        %v247 = vld [vmem:[%s2 + $0x10] sm:$0xff]
        %v248 = vld [vmem:[%s2 + $0x18] sm:$0xff]
        %v249 = vld [vmem:[%s2 + $0x20] sm:$0xff]
        %v250 = vld [vmem:[%s2 + $0x28] sm:$0xff]
        %v251 = vld [vmem:[%s2 + $0x30] sm:$0xff]
        %v252 = vld [vmem:[%s2 + $0x38] sm:$0xff]
        %v253 = vld [vmem:[%s2 + $0x40] sm:$0xff]
        %v254 = vld [vmem:[%s2 + $0x48] sm:$0xff]
        %v255 = vld [vmem:[%s2 + $0x50] sm:$0xff]
        %v256 = vld [vmem:[%s2 + $0x58] sm:$0xff]
        %v257 = vld [vmem:[%s2 + $0x60] sm:$0xff]
        %v258 = vld [vmem:[%s2 + $0x68] sm:$0xff]
        %v259 = vld [vmem:[%s2 + $0x70] sm:$0xff]
        %v260 = vld [vmem:[%s2 + $0x78] sm:$0xff]
        %262 = vset.pattern.permute.xlu0 0
        %263 = vperm.xlu0 %262, %v229
        %v264 = vpop.permute.xlu0 %263
        %267 = vset.pattern.permute.xlu0 0
        %268 = vperm.xlu0 %267, %v230
        %v269 = vpop.permute.xlu0 %268
        %272 = vset.pattern.permute.xlu0 0
        %273 = vperm.xlu0 %272, %v231
        %v274 = vpop.permute.xlu0 %273
        %277 = vset.pattern.permute.xlu0 0
        %278 = vperm.xlu0 %277, %v232
        %v279 = vpop.permute.xlu0 %278
        %282 = vset.pattern.permute.xlu0 0
        %283 = vperm.xlu0 %282, %v233
        %v284 = vpop.permute.xlu0 %283
        %287 = vset.pattern.permute.xlu0 0
        %288 = vperm.xlu0 %287, %v234
        %v289 = vpop.permute.xlu0 %288
        %292 = vset.pattern.permute.xlu0 0
        %293 = vperm.xlu0 %292, %v235
        %v294 = vpop.permute.xlu0 %293
        %297 = vset.pattern.permute.xlu0 0
        %298 = vperm.xlu0 %297, %v236
        %v299 = vpop.permute.xlu0 %298
        %302 = vset.pattern.permute.xlu0 0
        %303 = vperm.xlu0 %302, %v237
        %v304 = vpop.permute.xlu0 %303
        %307 = vset.pattern.permute.xlu0 0
        %308 = vperm.xlu0 %307, %v238
        %v309 = vpop.permute.xlu0 %308
        %312 = vset.pattern.permute.xlu0 0
        %313 = vperm.xlu0 %312, %v239
        %v314 = vpop.permute.xlu0 %313
        %317 = vset.pattern.permute.xlu0 0
        %318 = vperm.xlu0 %317, %v240
        %v319 = vpop.permute.xlu0 %318
        %322 = vset.pattern.permute.xlu0 0
        %323 = vperm.xlu0 %322, %v241
        %v324 = vpop.permute.xlu0 %323
        %327 = vset.pattern.permute.xlu0 0
        %328 = vperm.xlu0 %327, %v242
        %v329 = vpop.permute.xlu0 %328
        %332 = vset.pattern.permute.xlu0 0
        %333 = vperm.xlu0 %332, %v243
        %v334 = vpop.permute.xlu0 %333
        %337 = vset.pattern.permute.xlu0 0
        %338 = vperm.xlu0 %337, %v244
        %v339 = vpop.permute.xlu0 %338
        %v342 = vlaneseq
        %v343 = vshrl.u32 %v342, 7
        %v344 = vsub.s32 0, %v343
        %v345 = vrot.slane %v228, %v344
        %v346 = vlaneseq
        %v347 = vshrl.u32 %v346, 7
        %v348 = vsub.s32 2, %v347
        %v349 = vrot.slane %v228, %v348
        %v350 = vlaneseq
        %v351 = vshrl.u32 %v350, 7
        %v352 = vsub.s32 4, %v351
        %v353 = vrot.slane %v228, %v352
        %v354 = vlaneseq
        %v355 = vshrl.u32 %v354, 7
        %v356 = vsub.s32 6, %v355
        %v357 = vrot.slane %v228, %v356
        %v362 = vlaneseq
        %v363 = vshrl.u32 %v362, 7
        %v364 = vsub.s32 0, %v363
        %v365 = vrot.slane %v345, %v364
        %v366 = vlaneseq
        %v367 = vshrl.u32 %v366, 7
        %v368 = vsub.s32 0, %v367
        %v369 = vrot.slane %v349, %v368
        %v370 = vlaneseq
        %v371 = vshrl.u32 %v370, 7
        %v372 = vsub.s32 0, %v371
        %v373 = vrot.slane %v353, %v372
        %v374 = vlaneseq
        %v375 = vshrl.u32 %v374, 7
        %v376 = vsub.s32 0, %v375
        %v377 = vrot.slane %v357, %v376
        %v378 = vmul.f32 %v264, %v365
        %v379 = vmul.f32 %v264, %v369
        %v380 = vmul.f32 %v264, %v373
        %v381 = vmul.f32 %v264, %v377
        %v382 = vmul.f32 %v269, %v365
        %v383 = vmul.f32 %v269, %v369
        %v384 = vmul.f32 %v269, %v373
        %v385 = vmul.f32 %v269, %v377
        %v386 = vmul.f32 %v274, %v365
        %v387 = vmul.f32 %v274, %v369
        %v388 = vmul.f32 %v274, %v373
        %v389 = vmul.f32 %v274, %v377
        %v390 = vmul.f32 %v279, %v365
        %v391 = vmul.f32 %v279, %v369
        %v392 = vmul.f32 %v279, %v373
        %v393 = vmul.f32 %v279, %v377
        %v394 = vmul.f32 %v284, %v365
        %v395 = vmul.f32 %v284, %v369
        %v396 = vmul.f32 %v284, %v373
        %v397 = vmul.f32 %v284, %v377
        %v398 = vmul.f32 %v289, %v365
        %v399 = vmul.f32 %v289, %v369
        %v400 = vmul.f32 %v289, %v373
        %v401 = vmul.f32 %v289, %v377
        %v402 = vmul.f32 %v294, %v365
        %v403 = vmul.f32 %v294, %v369
        %v404 = vmul.f32 %v294, %v373
        %v405 = vmul.f32 %v294, %v377
        %v406 = vmul.f32 %v299, %v365
        %v407 = vmul.f32 %v299, %v369
        %v408 = vmul.f32 %v299, %v373
        %v409 = vmul.f32 %v299, %v377
        %v410 = vmul.f32 %v304, %v365
        %v411 = vmul.f32 %v304, %v369
        %v412 = vmul.f32 %v304, %v373
        %v413 = vmul.f32 %v304, %v377
        %v414 = vmul.f32 %v309, %v365
        %v415 = vmul.f32 %v309, %v369
        %v416 = vmul.f32 %v309, %v373
        %v417 = vmul.f32 %v309, %v377
        %v418 = vmul.f32 %v314, %v365
        %v419 = vmul.f32 %v314, %v369
        %v420 = vmul.f32 %v314, %v373
        %v421 = vmul.f32 %v314, %v377
        %v422 = vmul.f32 %v319, %v365
        %v423 = vmul.f32 %v319, %v369
        %v424 = vmul.f32 %v319, %v373
        %v425 = vmul.f32 %v319, %v377
        %v426 = vmul.f32 %v324, %v365
        %v427 = vmul.f32 %v324, %v369
        %v428 = vmul.f32 %v324, %v373
        %v429 = vmul.f32 %v324, %v377
        %v430 = vmul.f32 %v329, %v365
        %v431 = vmul.f32 %v329, %v369
        %v432 = vmul.f32 %v329, %v373
        %v433 = vmul.f32 %v329, %v377
        %v434 = vmul.f32 %v334, %v365
        %v435 = vmul.f32 %v334, %v369
        %v436 = vmul.f32 %v334, %v373
        %v437 = vmul.f32 %v334, %v377
        %v438 = vmul.f32 %v339, %v365
        %v439 = vmul.f32 %v339, %v369
        %v440 = vmul.f32 %v339, %v373
        %v441 = vmul.f32 %v339, %v377
        %443 = vset.pattern.permute.xlu0 0
        %444 = vperm.xlu0 %443, %v245
        %v445 = vpop.permute.xlu0 %444
        %448 = vset.pattern.permute.xlu0 0
        %449 = vperm.xlu0 %448, %v246
        %v450 = vpop.permute.xlu0 %449
        %453 = vset.pattern.permute.xlu0 0
        %454 = vperm.xlu0 %453, %v247
        %v455 = vpop.permute.xlu0 %454
        %458 = vset.pattern.permute.xlu0 0
        %459 = vperm.xlu0 %458, %v248
        %v460 = vpop.permute.xlu0 %459
        %463 = vset.pattern.permute.xlu0 0
        %464 = vperm.xlu0 %463, %v249
        %v465 = vpop.permute.xlu0 %464
        %468 = vset.pattern.permute.xlu0 0
        %469 = vperm.xlu0 %468, %v250
        %v470 = vpop.permute.xlu0 %469
        %473 = vset.pattern.permute.xlu0 0
        %474 = vperm.xlu0 %473, %v251
        %v475 = vpop.permute.xlu0 %474
        %478 = vset.pattern.permute.xlu0 0
        %479 = vperm.xlu0 %478, %v252
        %v480 = vpop.permute.xlu0 %479
        %483 = vset.pattern.permute.xlu0 0
        %484 = vperm.xlu0 %483, %v253
        %v485 = vpop.permute.xlu0 %484
        %488 = vset.pattern.permute.xlu0 0
        %489 = vperm.xlu0 %488, %v254
        %v490 = vpop.permute.xlu0 %489
        %493 = vset.pattern.permute.xlu0 0
        %494 = vperm.xlu0 %493, %v255
        %v495 = vpop.permute.xlu0 %494
        %498 = vset.pattern.permute.xlu0 0
        %499 = vperm.xlu0 %498, %v256
        %v500 = vpop.permute.xlu0 %499
        %503 = vset.pattern.permute.xlu0 0
        %504 = vperm.xlu0 %503, %v257
        %v505 = vpop.permute.xlu0 %504
        %508 = vset.pattern.permute.xlu0 0
        %509 = vperm.xlu0 %508, %v258
        %v510 = vpop.permute.xlu0 %509
        %513 = vset.pattern.permute.xlu0 0
        %514 = vperm.xlu0 %513, %v259
        %v515 = vpop.permute.xlu0 %514
        %518 = vset.pattern.permute.xlu0 0
        %519 = vperm.xlu0 %518, %v260
        %v520 = vpop.permute.xlu0 %519
        %v522 = vadd.f32 %v445, %v378
        %v523 = vadd.f32 %v445, %v379
        %v524 = vadd.f32 %v445, %v380
        %v525 = vadd.f32 %v445, %v381
        %v526 = vadd.f32 %v450, %v382
        %v527 = vadd.f32 %v450, %v383
        %v528 = vadd.f32 %v450, %v384
        %v529 = vadd.f32 %v450, %v385
        %v530 = vadd.f32 %v455, %v386
        %v531 = vadd.f32 %v455, %v387
        %v532 = vadd.f32 %v455, %v388
        %v533 = vadd.f32 %v455, %v389
        %v534 = vadd.f32 %v460, %v390
        %v535 = vadd.f32 %v460, %v391
        %v536 = vadd.f32 %v460, %v392
        %v537 = vadd.f32 %v460, %v393
        %v538 = vadd.f32 %v465, %v394
        %v539 = vadd.f32 %v465, %v395
        %v540 = vadd.f32 %v465, %v396
        %v541 = vadd.f32 %v465, %v397
        %v542 = vadd.f32 %v470, %v398
        %v543 = vadd.f32 %v470, %v399
        %v544 = vadd.f32 %v470, %v400
        %v545 = vadd.f32 %v470, %v401
        %v546 = vadd.f32 %v475, %v402
        %v547 = vadd.f32 %v475, %v403
        %v548 = vadd.f32 %v475, %v404
        %v549 = vadd.f32 %v475, %v405
        %v550 = vadd.f32 %v480, %v406
        %v551 = vadd.f32 %v480, %v407
        %v552 = vadd.f32 %v480, %v408
        %v553 = vadd.f32 %v480, %v409
        %v554 = vadd.f32 %v485, %v410
        %v555 = vadd.f32 %v485, %v411
        %v556 = vadd.f32 %v485, %v412
        %v557 = vadd.f32 %v485, %v413
        %v558 = vadd.f32 %v490, %v414
        %v559 = vadd.f32 %v490, %v415
        %v560 = vadd.f32 %v490, %v416
        %v561 = vadd.f32 %v490, %v417
        %v562 = vadd.f32 %v495, %v418
        %v563 = vadd.f32 %v495, %v419
        %v564 = vadd.f32 %v495, %v420
        %v565 = vadd.f32 %v495, %v421
        %v566 = vadd.f32 %v500, %v422
        %v567 = vadd.f32 %v500, %v423
        %v568 = vadd.f32 %v500, %v424
        %v569 = vadd.f32 %v500, %v425
        %v570 = vadd.f32 %v505, %v426
        %v571 = vadd.f32 %v505, %v427
        %v572 = vadd.f32 %v505, %v428
        %v573 = vadd.f32 %v505, %v429
        %v574 = vadd.f32 %v510, %v430
        %v575 = vadd.f32 %v510, %v431
        %v576 = vadd.f32 %v510, %v432
        %v577 = vadd.f32 %v510, %v433
        %v578 = vadd.f32 %v515, %v434
        %v579 = vadd.f32 %v515, %v435
        %v580 = vadd.f32 %v515, %v436
        %v581 = vadd.f32 %v515, %v437
        %v582 = vadd.f32 %v520, %v438
        %v583 = vadd.f32 %v520, %v439
        %v584 = vadd.f32 %v520, %v440
        %v585 = vadd.f32 %v520, %v441
        %586 = vset.pattern.permute.xlu0 1
        %587 = vperm.xlu0 %586, %v229
        %v588 = vpop.permute.xlu0 %587
        %590 = vset.pattern.permute.xlu0 1
        %591 = vperm.xlu0 %590, %v230
        %v592 = vpop.permute.xlu0 %591
        %594 = vset.pattern.permute.xlu0 1
        %595 = vperm.xlu0 %594, %v231
        %v596 = vpop.permute.xlu0 %595
        %598 = vset.pattern.permute.xlu0 1
        %599 = vperm.xlu0 %598, %v232
        %v600 = vpop.permute.xlu0 %599
        %602 = vset.pattern.permute.xlu0 1
        %603 = vperm.xlu0 %602, %v233
        %v604 = vpop.permute.xlu0 %603
        %606 = vset.pattern.permute.xlu0 1
        %607 = vperm.xlu0 %606, %v234
        %v608 = vpop.permute.xlu0 %607
        %610 = vset.pattern.permute.xlu0 1
        %611 = vperm.xlu0 %610, %v235
        %v612 = vpop.permute.xlu0 %611
        %614 = vset.pattern.permute.xlu0 1
        %615 = vperm.xlu0 %614, %v236
        %v616 = vpop.permute.xlu0 %615
        %618 = vset.pattern.permute.xlu0 1
        %619 = vperm.xlu0 %618, %v237
        %v620 = vpop.permute.xlu0 %619
        %622 = vset.pattern.permute.xlu0 1
        %623 = vperm.xlu0 %622, %v238
        %v624 = vpop.permute.xlu0 %623
        %626 = vset.pattern.permute.xlu0 1
        %627 = vperm.xlu0 %626, %v239
        %v628 = vpop.permute.xlu0 %627
        %630 = vset.pattern.permute.xlu0 1
        %631 = vperm.xlu0 %630, %v240
        %v632 = vpop.permute.xlu0 %631
        %634 = vset.pattern.permute.xlu0 1
        %635 = vperm.xlu0 %634, %v241
        %v636 = vpop.permute.xlu0 %635
        %638 = vset.pattern.permute.xlu0 1
        %639 = vperm.xlu0 %638, %v242
        %v640 = vpop.permute.xlu0 %639
        %642 = vset.pattern.permute.xlu0 1
        %643 = vperm.xlu0 %642, %v243
        %v644 = vpop.permute.xlu0 %643
        %646 = vset.pattern.permute.xlu0 1
        %647 = vperm.xlu0 %646, %v244
        %v648 = vpop.permute.xlu0 %647
        %v650 = vlaneseq
        %v651 = vshrl.u32 %v650, 7
        %v652 = vsub.s32 1, %v651
        %v653 = vrot.slane %v228, %v652
        %v654 = vlaneseq
        %v655 = vshrl.u32 %v654, 7
        %v656 = vsub.s32 3, %v655
        %v657 = vrot.slane %v228, %v656
        %v658 = vlaneseq
        %v659 = vshrl.u32 %v658, 7
        %v660 = vsub.s32 5, %v659
        %v661 = vrot.slane %v228, %v660
        %v662 = vlaneseq
        %v663 = vshrl.u32 %v662, 7
        %v664 = vsub.s32 7, %v663
        %v665 = vrot.slane %v228, %v664
        %v670 = vlaneseq
        %v671 = vshrl.u32 %v670, 7
        %v672 = vsub.s32 1, %v671
        %v673 = vrot.slane %v653, %v672
        %v674 = vlaneseq
        %v675 = vshrl.u32 %v674, 7
        %v676 = vsub.s32 1, %v675
        %v677 = vrot.slane %v657, %v676
        %v678 = vlaneseq
        %v679 = vshrl.u32 %v678, 7
        %v680 = vsub.s32 1, %v679
        %v681 = vrot.slane %v661, %v680
        %v682 = vlaneseq
        %v683 = vshrl.u32 %v682, 7
        %v684 = vsub.s32 1, %v683
        %v685 = vrot.slane %v665, %v684
        %v686 = vmul.f32 %v588, %v673
        %v687 = vmul.f32 %v588, %v677
        %v688 = vmul.f32 %v588, %v681
        %v689 = vmul.f32 %v588, %v685
        %v690 = vmul.f32 %v592, %v673
        %v691 = vmul.f32 %v592, %v677
        %v692 = vmul.f32 %v592, %v681
        %v693 = vmul.f32 %v592, %v685
        %v694 = vmul.f32 %v596, %v673
        %v695 = vmul.f32 %v596, %v677
        %v696 = vmul.f32 %v596, %v681
        %v697 = vmul.f32 %v596, %v685
        %v698 = vmul.f32 %v600, %v673
        %v699 = vmul.f32 %v600, %v677
        %v700 = vmul.f32 %v600, %v681
        %v701 = vmul.f32 %v600, %v685
        %v702 = vmul.f32 %v604, %v673
        %v703 = vmul.f32 %v604, %v677
        %v704 = vmul.f32 %v604, %v681
        %v705 = vmul.f32 %v604, %v685
        %v706 = vmul.f32 %v608, %v673
        %v707 = vmul.f32 %v608, %v677
        %v708 = vmul.f32 %v608, %v681
        %v709 = vmul.f32 %v608, %v685
        %v710 = vmul.f32 %v612, %v673
        %v711 = vmul.f32 %v612, %v677
        %v712 = vmul.f32 %v612, %v681
        %v713 = vmul.f32 %v612, %v685
        %v714 = vmul.f32 %v616, %v673
        %v715 = vmul.f32 %v616, %v677
        %v716 = vmul.f32 %v616, %v681
        %v717 = vmul.f32 %v616, %v685
        %v718 = vmul.f32 %v620, %v673
        %v719 = vmul.f32 %v620, %v677
        %v720 = vmul.f32 %v620, %v681
        %v721 = vmul.f32 %v620, %v685
        %v722 = vmul.f32 %v624, %v673
        %v723 = vmul.f32 %v624, %v677
        %v724 = vmul.f32 %v624, %v681
        %v725 = vmul.f32 %v624, %v685
        %v726 = vmul.f32 %v628, %v673
        %v727 = vmul.f32 %v628, %v677
        %v728 = vmul.f32 %v628, %v681
        %v729 = vmul.f32 %v628, %v685
        %v730 = vmul.f32 %v632, %v673
        %v731 = vmul.f32 %v632, %v677
        %v732 = vmul.f32 %v632, %v681
        %v733 = vmul.f32 %v632, %v685
        %v734 = vmul.f32 %v636, %v673
        %v735 = vmul.f32 %v636, %v677
        %v736 = vmul.f32 %v636, %v681
        %v737 = vmul.f32 %v636, %v685
        %v738 = vmul.f32 %v640, %v673
        %v739 = vmul.f32 %v640, %v677
        %v740 = vmul.f32 %v640, %v681
        %v741 = vmul.f32 %v640, %v685
        %v742 = vmul.f32 %v644, %v673
        %v743 = vmul.f32 %v644, %v677
        %v744 = vmul.f32 %v644, %v681
        %v745 = vmul.f32 %v644, %v685
        %v746 = vmul.f32 %v648, %v673
        %v747 = vmul.f32 %v648, %v677
        %v748 = vmul.f32 %v648, %v681
        %v749 = vmul.f32 %v648, %v685
        %v750 = vadd.f32 %v522, %v686
        %v751 = vadd.f32 %v523, %v687
        %v752 = vadd.f32 %v524, %v688
        %v753 = vadd.f32 %v525, %v689
        %v754 = vadd.f32 %v526, %v690
        %v755 = vadd.f32 %v527, %v691
        %v756 = vadd.f32 %v528, %v692
        %v757 = vadd.f32 %v529, %v693
        %v758 = vadd.f32 %v530, %v694
        %v759 = vadd.f32 %v531, %v695
        %v760 = vadd.f32 %v532, %v696
        %v761 = vadd.f32 %v533, %v697
        %v762 = vadd.f32 %v534, %v698
        %v763 = vadd.f32 %v535, %v699
        %v764 = vadd.f32 %v536, %v700
        %v765 = vadd.f32 %v537, %v701
        %v766 = vadd.f32 %v538, %v702
        %v767 = vadd.f32 %v539, %v703
        %v768 = vadd.f32 %v540, %v704
        %v769 = vadd.f32 %v541, %v705
        %v770 = vadd.f32 %v542, %v706
        %v771 = vadd.f32 %v543, %v707
        %v772 = vadd.f32 %v544, %v708
        %v773 = vadd.f32 %v545, %v709
        %v774 = vadd.f32 %v546, %v710
        %v775 = vadd.f32 %v547, %v711
        %v776 = vadd.f32 %v548, %v712
        %v777 = vadd.f32 %v549, %v713
        %v778 = vadd.f32 %v550, %v714
        %v779 = vadd.f32 %v551, %v715
        %v780 = vadd.f32 %v552, %v716
        %v781 = vadd.f32 %v553, %v717
        %v782 = vadd.f32 %v554, %v718
        %v783 = vadd.f32 %v555, %v719
        %v784 = vadd.f32 %v556, %v720
        %v785 = vadd.f32 %v557, %v721
        %v786 = vadd.f32 %v558, %v722
        %v787 = vadd.f32 %v559, %v723
        %v788 = vadd.f32 %v560, %v724
        %v789 = vadd.f32 %v561, %v725
        %v790 = vadd.f32 %v562, %v726
        %v791 = vadd.f32 %v563, %v727
        %v792 = vadd.f32 %v564, %v728
        %v793 = vadd.f32 %v565, %v729
        %v794 = vadd.f32 %v566, %v730
        %v795 = vadd.f32 %v567, %v731
        %v796 = vadd.f32 %v568, %v732
        %v797 = vadd.f32 %v569, %v733
        %v798 = vadd.f32 %v570, %v734
        %v799 = vadd.f32 %v571, %v735
        %v800 = vadd.f32 %v572, %v736
        %v801 = vadd.f32 %v573, %v737
        %v802 = vadd.f32 %v574, %v738
        %v803 = vadd.f32 %v575, %v739
        %v804 = vadd.f32 %v576, %v740
        %v805 = vadd.f32 %v577, %v741
        %v806 = vadd.f32 %v578, %v742
        %v807 = vadd.f32 %v579, %v743
        %v808 = vadd.f32 %v580, %v744
        %v809 = vadd.f32 %v581, %v745
        %v810 = vadd.f32 %v582, %v746
        %v811 = vadd.f32 %v583, %v747
        %v812 = vadd.f32 %v584, %v748
        %v813 = vadd.f32 %v585, %v749
        %v814 = vtanh.pop %v750
        %v815 = vtanh.pop %v751
        %v816 = vtanh.pop %v752
        %v817 = vtanh.pop %v753
        %v818 = vtanh.pop %v754
        %v819 = vtanh.pop %v755
        %v820 = vtanh.pop %v756
        %v821 = vtanh.pop %v757
        %v822 = vtanh.pop %v758
        %v823 = vtanh.pop %v759
        %v824 = vtanh.pop %v760
        %v825 = vtanh.pop %v761
        %v826 = vtanh.pop %v762
        %v827 = vtanh.pop %v763
        %v828 = vtanh.pop %v764
        %v829 = vtanh.pop %v765
        %v830 = vtanh.pop %v766
        %v831 = vtanh.pop %v767
        %v832 = vtanh.pop %v768
        %v833 = vtanh.pop %v769
        %v834 = vtanh.pop %v770
        %v835 = vtanh.pop %v771
        %v836 = vtanh.pop %v772
        %v837 = vtanh.pop %v773
        %v838 = vtanh.pop %v774
        %v839 = vtanh.pop %v775
        %v840 = vtanh.pop %v776
        %v841 = vtanh.pop %v777
        %v842 = vtanh.pop %v778
        %v843 = vtanh.pop %v779
        %v844 = vtanh.pop %v780
        %v845 = vtanh.pop %v781
        %v846 = vtanh.pop %v782
        %v847 = vtanh.pop %v783
        %v848 = vtanh.pop %v784
        %v849 = vtanh.pop %v785
        %v850 = vtanh.pop %v786
        %v851 = vtanh.pop %v787
        %v852 = vtanh.pop %v788
        %v853 = vtanh.pop %v789
        %v854 = vtanh.pop %v790
        %v855 = vtanh.pop %v791
        %v856 = vtanh.pop %v792
        %v857 = vtanh.pop %v793
        %v858 = vtanh.pop %v794
        %v859 = vtanh.pop %v795
        %v860 = vtanh.pop %v796
        %v861 = vtanh.pop %v797
        %v862 = vtanh.pop %v798
        %v863 = vtanh.pop %v799
        %v864 = vtanh.pop %v800
        %v865 = vtanh.pop %v801
        %v866 = vtanh.pop %v802
        %v867 = vtanh.pop %v803
        %v868 = vtanh.pop %v804
        %v869 = vtanh.pop %v805
        %v870 = vtanh.pop %v806
        %v871 = vtanh.pop %v807
        %v872 = vtanh.pop %v808
        %v873 = vtanh.pop %v809
        %v874 = vtanh.pop %v810
        %v875 = vtanh.pop %v811
        %v876 = vtanh.pop %v812
        %v877 = vtanh.pop %v813
        %v878 = vld [vmem:[%s3] sm:$0x1]
        %v879 = vld [vmem:[#allocation2] sm:$0x1]
        %881 = vset.pattern.permute.xlu0 0
        %882 = vperm.xlu0 %881, %v879
        %v883 = vpop.permute.xlu0 %882
        %v885 = vlaneseq
        %v886 = vshrl.u32 %v885, 7
        %v887 = vsub.s32 0, %v886
        %v888 = vrot.slane %v883, %v887
        %889 = vmatprep.subr.mxu0 %v815
        %890 = vmatpush1.msra.mxu0 %v814
        %891 = vmatprep.subr.mxu0 %v819
        %892 = vmatpush1.msra.mxu0 %v818
        %893 = vmatprep.subr.mxu0 %v823
        %894 = vmatpush1.msra.mxu0 %v822
        %895 = vmatprep.subr.mxu0 %v827
        %896 = vmatpush1.msra.mxu0 %v826
        %897 = vmatprep.subr.mxu0 %v831
        %898 = vmatpush1.msra.mxu0 %v830
        %899 = vmatprep.subr.mxu0 %v835
        %900 = vmatpush1.msra.mxu0 %v834
        %901 = vmatprep.subr.mxu0 %v839
        %902 = vmatpush1.msra.mxu0 %v838
        %903 = vmatprep.subr.mxu0 %v843
        %904 = vmatpush1.msra.mxu0 %v842
        %905 = vmatprep.subr.mxu0 %v847
        %906 = vmatpush1.msra.mxu0 %v846
        %907 = vmatprep.subr.mxu0 %v851
        %908 = vmatpush1.msra.mxu0 %v850
        %909 = vmatprep.subr.mxu0 %v855
        %910 = vmatpush1.msra.mxu0 %v854
        %911 = vmatprep.subr.mxu0 %v859
        %912 = vmatpush1.msra.mxu0 %v858
        %913 = vmatprep.subr.mxu0 %v863
        %914 = vmatpush1.msra.mxu0 %v862
        %915 = vmatprep.subr.mxu0 %v867
        %916 = vmatpush1.msra.mxu0 %v866
        %917 = vmatprep.subr.mxu0 %v871
        %918 = vmatpush1.msra.mxu0 %v870
        %919 = vmatprep.subr.mxu0 %v875
        %920 = vmatpush1.msra.mxu0 %v874
        %921 = vmatprep.subr.mxu0 0.0
        %922 = vmatpush1.msra.mxu0 0.0
        %923 = vmatprep.subr.mxu0 0.0
        %924 = vmatpush1.msra.mxu0 0.0
        %925 = vmatprep.subr.mxu0 0.0
        %926 = vmatpush1.msra.mxu0 0.0
        %927 = vmatprep.subr.mxu0 0.0
        %928 = vmatpush1.msra.mxu0 0.0
        %929 = vmatprep.subr.mxu0 0.0
        %930 = vmatpush1.msra.mxu0 0.0
        %931 = vmatprep.subr.mxu0 0.0
        %932 = vmatpush1.msra.mxu0 0.0
        %933 = vmatprep.subr.mxu0 0.0
        %934 = vmatpush1.msra.mxu0 0.0
        %935 = vmatprep.subr.mxu0 0.0
        %936 = vmatpush1.msra.mxu0 0.0
        %937 = vmatprep.subr.mxu0 0.0
        %938 = vmatpush1.msra.mxu0 0.0
        %939 = vmatprep.subr.mxu0 0.0
        %940 = vmatpush1.msra.mxu0 0.0
        %941 = vmatprep.subr.mxu0 0.0
        %942 = vmatpush1.msra.mxu0 0.0
        %943 = vmatprep.subr.mxu0 0.0
        %944 = vmatpush1.msra.mxu0 0.0
        %945 = vmatprep.subr.mxu0 0.0
        %946 = vmatpush1.msra.mxu0 0.0
        %947 = vmatprep.subr.mxu0 0.0
        %948 = vmatpush1.msra.mxu0 0.0
        %949 = vmatprep.subr.mxu0 0.0
        %950 = vmatpush1.msra.mxu0 0.0
        %951 = vmatprep.subr.mxu0 0.0
        %952 = vmatpush1.msra.mxu0 0.0
        %953 = vmatprep.mubr.f32.mxu0 0.0
        %954 = vmatmul.mubr.f32.gmra.mrb[0].mxu0 %v878
        %v955 = vpop.f32.mrb[0].mxu0
        %v956 = vadd.f32 %v888, %v955
        %v957 = vpop.f32.mrb[0].mxu0
        %v958 = vadd.f32 %v888, %v957
        %959 = vdwg.mxu0
        %960 = vmatprep.subr.mxu0 %v817
        %961 = vmatpush1.msra.mxu0 %v816
        %962 = vmatprep.subr.mxu0 %v821
        %963 = vmatpush1.msra.mxu0 %v820
        %964 = vmatprep.subr.mxu0 %v825
        %965 = vmatpush1.msra.mxu0 %v824
        %966 = vmatprep.subr.mxu0 %v829
        %967 = vmatpush1.msra.mxu0 %v828
        %968 = vmatprep.subr.mxu0 %v833
        %969 = vmatpush1.msra.mxu0 %v832
        %970 = vmatprep.subr.mxu0 %v837
        %971 = vmatpush1.msra.mxu0 %v836
        %972 = vmatprep.subr.mxu0 %v841
        %973 = vmatpush1.msra.mxu0 %v840
        %974 = vmatprep.subr.mxu0 %v845
        %975 = vmatpush1.msra.mxu0 %v844
        %976 = vmatprep.subr.mxu0 %v849
        %977 = vmatpush1.msra.mxu0 %v848
        %978 = vmatprep.subr.mxu0 %v853
        %979 = vmatpush1.msra.mxu0 %v852
        %980 = vmatprep.subr.mxu0 %v857
        %981 = vmatpush1.msra.mxu0 %v856
        %982 = vmatprep.subr.mxu0 %v861
        %983 = vmatpush1.msra.mxu0 %v860
        %984 = vmatprep.subr.mxu0 %v865
        %985 = vmatpush1.msra.mxu0 %v864
        %986 = vmatprep.subr.mxu0 %v869
        %987 = vmatpush1.msra.mxu0 %v868
        %988 = vmatprep.subr.mxu0 %v873
        %989 = vmatpush1.msra.mxu0 %v872
        %990 = vmatprep.subr.mxu0 %v877
        %991 = vmatpush1.msra.mxu0 %v876
        %992 = vmatprep.subr.mxu0 0.0
        %993 = vmatpush1.msra.mxu0 0.0
        %994 = vmatprep.subr.mxu0 0.0
        %995 = vmatpush1.msra.mxu0 0.0
        %996 = vmatprep.subr.mxu0 0.0
        %997 = vmatpush1.msra.mxu0 0.0
        %998 = vmatprep.subr.mxu0 0.0
        %999 = vmatpush1.msra.mxu0 0.0
        %1000 = vmatprep.subr.mxu0 0.0
        %1001 = vmatpush1.msra.mxu0 0.0
        %1002 = vmatprep.subr.mxu0 0.0
        %1003 = vmatpush1.msra.mxu0 0.0
        %1004 = vmatprep.subr.mxu0 0.0
        %1005 = vmatpush1.msra.mxu0 0.0
        %1006 = vmatprep.subr.mxu0 0.0
        %1007 = vmatpush1.msra.mxu0 0.0
        %1008 = vmatprep.subr.mxu0 0.0
        %1009 = vmatpush1.msra.mxu0 0.0
        %1010 = vmatprep.subr.mxu0 0.0
        %1011 = vmatpush1.msra.mxu0 0.0
        %1012 = vmatprep.subr.mxu0 0.0
        %1013 = vmatpush1.msra.mxu0 0.0
        %1014 = vmatprep.subr.mxu0 0.0
        %1015 = vmatpush1.msra.mxu0 0.0
        %1016 = vmatprep.subr.mxu0 0.0
        %1017 = vmatpush1.msra.mxu0 0.0
        %1018 = vmatprep.subr.mxu0 0.0
        %1019 = vmatpush1.msra.mxu0 0.0
        %1020 = vmatprep.subr.mxu0 0.0
        %1021 = vmatpush1.msra.mxu0 0.0
        %1022 = vmatprep.subr.mxu0 0.0
        %1023 = vmatpush1.msra.mxu0 0.0
        %1024 = vmatprep.mubr.f32.mxu0 0.0
        %1025 = vmatmul.mubr.f32.gmra.mrb[0].mxu0 %v878
        %v1026 = vpop.f32.mrb[0].mxu0
        %v1027 = vadd.f32 %v888, %v1026
        %v1028 = vpop.f32.mrb[0].mxu0
        %v1029 = vadd.f32 %v888, %v1028
        %1030 = vdwg.mxu0
        %v1035 = vcombine.low %v956, %v958
        %v1036 = vcombine.low %v1027, %v1029
        %v1038 = vunpack.c.l.s4 1966171168
        %v1039 = vunpack.c.0.s8 %v1038
        %v1040 = vlaneseq
        %v1041 = vshrl.u32 %v1040, 7
        %v1042 = vsub.s32 %v1039, %v1041
        %v1043 = vrot.slane %v1035, %v1042
        %v1045 = vunpack.c.l.s4 1966171168
        %v1046 = vunpack.c.0.s8 %v1045
        %v1047 = vlaneseq
        %v1048 = vshrl.u32 %v1047, 7
        %v1049 = vsub.s32 %v1046, %v1048
        %v1050 = vrot.slane %v1036, %v1049
        %v1051 = vcombine.low %v1043, %v1050
        %v1053 = vunpack.c.l.s4 1966171168
        %v1054 = vunpack.c.0.s8 %v1053
        %v1055 = vlaneseq
        %v1056 = vshrl.u32 %v1055, 7
        %v1057 = vsub.s32 %v1054, %v1056
        %v1058 = vrot.slane %v1051, %v1057
        %v1060 = vlaneseq
        %vm1061 = vcmp.ge.s32.totalorder %v1060, 0
        %vm1062 = vcmp.lt.s32.totalorder %v1060, 512
        %vm1063 = vmand %vm1061, %vm1062
        %1064 = vst.msk [vmem:[%s220] sm:$0xf] %vm1063, %v1058
        %s1065 = sand.u32 %s139, 1
        %s1066 = scalar_lea.sflag [#allocation4], %s1065
        %s1067 = sand.u32 %s139, 1
        %s1068 = smul.addr %s1067, 4
        %s1069 = scalar_lea.vmem [#allocation3], %s1068
        // Predicated region
        $region41: #{tpu_custom_call.1} parent=39 // pred_check
          %p1070 = pneg %p149
        $region42: #{tpu_custom_call.1} parent=39 // pred_check_branch
          %1072 = sbr.rel (%p1070) target = $region44
        $region43: #{tpu_custom_call.1} parent=39 // pred_region
          %s1073 = smul.u32 4, %s21
          %s1075 = ssub.s32 64, 64
          %1076 = vsyncadd %s1066, %s1075
          %s1077 = smul.addr %s1073, 16
          %s1078 = scalar_lea.hbm %s5, %s1077
          %s1080 = sshll.u32 %s1069, 4
          %s1081 = int_to_ptr.vmem [resolvable:$true] %s1080
          %1083 = dma.vmem_to_hbm [thread:$0]  %s1081, 64, %s1078, %s1066
        $region44: #{tpu_custom_call.1} parent=39 // pred_fallthru
          _
      $region40: #{tpu_custom_call.1} parent=5 // pred_fallthru
        _
      %p1084 = scmp.le.s32.totalorder 2, %s16
      // Predicated region
      $region45: #{tpu_custom_call.1} parent=5 // pred_check
        %p1085 = pneg %p1084
      $region46: #{tpu_custom_call.1} parent=5 // pred_check_branch
        %1087 = sbr.rel (%p1085) target = $region48
      $region47: #{tpu_custom_call.1} parent=5 // pred_region
        %s1088 = ssub.s32 %s16, 2
        // Predicated region
        $region49: #{tpu_custom_call.1} parent=47 // pred_check
          %p1089 = pneg %p155
        $region50: #{tpu_custom_call.1} parent=47 // pred_check_branch
          %1091 = sbr.rel (%p1089) target = $region52
        $region51: #{tpu_custom_call.1} parent=47 // pred_region
          %s1092 = sand.u32 %s140, 1
          %s1093 = scalar_lea.sflag [#allocation4], %s1092
          %s1094 = sand.u32 %s140, 1
          %s1095 = smul.addr %s1094, 4
          %s1096 = scalar_lea.vmem [#allocation3], %s1095
          %1097 = dma.done %s1093, 64
        $region52: #{tpu_custom_call.1} parent=47 // pred_fallthru
          _
      $region48: #{tpu_custom_call.1} parent=5 // pred_fallthru
        _
    $region6: #{tpu_custom_call.1} parent=1 // loop_footer
      %s20 = sadd.s32 1, %s16
    $region7: #{tpu_custom_call.1} parent=1 // loop_footer_branch
      %15 = sbr.rel target = $region3
    $region8: #{tpu_custom_call.1} parent=1 // loop_exit
      _
    %1098 = vsyncpa [#allocation4], 1
    %s1099 = scalar_lea.sflag [#allocation4], 1
    %1100 = vsyncpa %s1099, 1

</llo_original>
